<compile_context>
chip_gen: v7x
topology: tpu7x:2x2x1
jax: 0.10.0
libtpu: 0.0.40
codegen_flags: <defaults>
</compile_context>

<pallas_src>
import math

import jax
import jax.numpy as jnp
from jax.experimental import pallas as pl
from jax.experimental.pallas import tpu as pltpu


_MIB = 1024 * 1024
_VMEM_BLOCK_BUDGET = 44 * _MIB   # target block footprint (fits v7x 64 MiB VMEM)
_VMEM_LIMIT_CAP = 56 * _MIB      # scoped-VMEM request cap (safe on every gen)
_RESIDENT_V_MAX = 16 * _MIB      # max bytes for a per-batch resident V operand
_FUSE_W_MAX = 4 * _MIB           # max bytes for W to ride resident in Pass B


def _round_up(x, m):
    return ((x + m - 1) // m) * m


def _vmem_limit(footprint_bytes):
    return int(min(_VMEM_LIMIT_CAP, max(32 * _MIB, footprint_bytes + 4 * _MIB)))


# ---------------------------------------------------------------------------
# Pass A: row/column-tiled feature transform   Y = X2d @ W (+ bias_row)
#   X2d: (M, K)   W: (K, Fo)   bias_row: (1, Fo) or None   Y: (M, Fo)
# ---------------------------------------------------------------------------
def _make_feat_kernel(has_bias):
    def kernel(*refs):
        if has_bias:
            x_ref, w_ref, b_ref, o_ref = refs
        else:
            x_ref, w_ref, o_ref = refs
            b_ref = None
        acc = jnp.dot(x_ref[...], w_ref[...], preferred_element_type=jnp.float32)
        if has_bias:
            acc = acc + b_ref[...]
        o_ref[...] = acc.astype(o_ref.dtype)
    return kernel


def _feat_matmul(x2d, w, bias_row, out_dtype):
    M, K = x2d.shape
    Fo = w.shape[1]
    has_bias = bias_row is not None
    x_isz = x2d.dtype.itemsize
    w_isz = w.dtype.itemsize
    o_isz = jnp.dtype(out_dtype).itemsize

    def foot(tm, tn):
        return (2 * tm * K * x_isz + 2 * K * tn * w_isz
                + 2 * tm * tn * o_isz + tm * tn * 4)

    tm_cands = [t for t in (512, 256, 128) if M % t == 0]
    tn_cands = [t for t in (Fo, 1024, 512, 256, 128)
                if t <= Fo and Fo % t == 0 and t % 128 == 0]
    tm, tn = tm_cands[-1], tn_cands[-1]
    picked = False
    for cm in tm_cands:
        for cn in tn_cands:
            if foot(cm, cn) <= _VMEM_BLOCK_BUDGET:
                tm, tn, picked = cm, cn, True
                break
        if picked:
            break
    # TODO(synk): also tile K (reduction axis) for extremely wide input features.

    in_specs = [
        pl.BlockSpec((tm, K), lambda i, j: (i, 0)),
        pl.BlockSpec((K, tn), lambda i, j: (0, j)),
    ]
    args = [x2d, w]
    if has_bias:
        in_specs.append(pl.BlockSpec((1, tn), lambda i, j: (0, j)))
        args.append(bias_row)

    return pl.pallas_call(
        _make_feat_kernel(has_bias),
        out_shape=jax.ShapeDtypeStruct((M, Fo), out_dtype),
        grid=(M // tm, Fo // tn),
        in_specs=in_specs,
        out_specs=pl.BlockSpec((tm, tn), lambda i, j: (i, j)),
        compiler_params=pltpu.CompilerParams(
            dimension_semantics=("parallel", "parallel"),
            vmem_limit_bytes=_vmem_limit(foot(tm, tn)),
        ),
    )(*args)


# ---------------------------------------------------------------------------
# Pass B: adjacency matmul   O[b] = (adj[b] @ V[b]) [@ W] [+ bias_row]
# Variant 1 (preferred): V resident per batch, no reduction grid axis.
# Variant 2 (fallback):  k-tiled streamed V + resident f32 accumulator.
# The adjacency tile is cast to compute_dtype inside the kernel.
# ---------------------------------------------------------------------------
def _make_spmm_resident_kernel(compute_dtype, has_w, has_bias):
    def kernel(*refs):
        it = iter(refs)
        adj_ref = next(it)
        v_ref = next(it)
        w_ref = next(it) if has_w else None
        b_ref = next(it) if has_bias else None
        o_ref = next(it)
        acc = jnp.dot(adj_ref[...].astype(compute_dtype), v_ref[...],
                      preferred_element_type=jnp.float32)
        if has_w:
            acc = jnp.dot(acc.astype(compute_dtype), w_ref[...],
                          preferred_element_type=jnp.float32)
        if has_bias:
            acc = acc + b_ref[...]
        o_ref[...] = acc.astype(o_ref.dtype)
    return kernel


def _spmm_resident(adj_in, v, w_res, bias_row, out_dtype, compute_dtype, tm, foot):
    B, Np, _ = adj_in.shape
    Fv = v.shape[2]
    has_w = w_res is not None
    has_bias = bias_row is not None
    Fo = w_res.shape[1] if has_w else Fv

    in_specs = [
        pl.BlockSpec((None, tm, Np), lambda b, i: (b, i, 0)),
        # Resident per batch: block index depends only on b, so V is DMA'd once
        # per batch instead of once per output row tile.
        pl.BlockSpec((None, Np, Fv), lambda b, i: (b, 0, 0)),
    ]
    args = [adj_in, v]
    if has_w:
        in_specs.append(pl.BlockSpec(w_res.shape, lambda b, i: (0, 0)))
        args.append(w_res)
    if has_bias:
        in_specs.append(pl.BlockSpec((1, Fo), lambda b, i: (0, 0)))
        args.append(bias_row)

    return pl.pallas_call(
        _make_spmm_resident_kernel(compute_dtype, has_w, has_bias),
        out_shape=jax.ShapeDtypeStruct((B, Np, Fo), out_dtype),
        grid=(B, Np // tm),
        in_specs=in_specs,
        out_specs=pl.BlockSpec((None, tm, Fo), lambda b, i: (b, i, 0)),
        compiler_params=pltpu.CompilerParams(
            dimension_semantics=("parallel", "parallel"),
            vmem_limit_bytes=_vmem_limit(foot),
        ),
    )(*args)


def _make_spmm_ktiled_kernel(compute_dtype, has_w, has_bias):
    def kernel(*refs):
        it = iter(refs)
        adj_ref = next(it)
        v_ref = next(it)
        w_ref = next(it) if has_w else None
        b_ref = next(it) if has_bias else None
        o_ref = next(it)
        acc_ref = next(it)

        @pl.when(pl.program_id(2) == 0)
        def _():
            acc_ref[...] = jnp.zeros_like(acc_ref)

        acc_ref[...] += jnp.dot(adj_ref[...].astype(compute_dtype), v_ref[...],
                                preferred_element_type=jnp.float32)

        @pl.when(pl.program_id(2) == pl.num_programs(2) - 1)
        def _():
            res = acc_ref[...]
            if has_w:
                res = jnp.dot(res.astype(compute_dtype), w_ref[...],
                              preferred_element_type=jnp.float32)
            if has_bias:
                res = res + b_ref[...]
            o_ref[...] = res.astype(o_ref.dtype)
    return kernel


def _spmm_ktiled(adj_in, v, w_res, bias_row, out_dtype, compute_dtype):
    B, Np, _ = adj_in.shape
    Fv = v.shape[2]
    has_w = w_res is not None
    has_bias = bias_row is not None
    Fo = w_res.shape[1] if has_w else Fv
    adj_isz = adj_in.dtype.itemsize
    v_isz = v.dtype.itemsize
    o_isz = jnp.dtype(out_dtype).itemsize
    w_bytes = (w_res.size * w_res.dtype.itemsize) if has_w else 0

    def foot(tm, tk):
        return (2 * tm * tk * adj_isz + 2 * tk * Fv * v_isz + 2 * w_bytes
                + 2 * tm * Fo * o_isz + tm * Fv * 4 + tm * Fo * 4)

    cands = [t for t in (1024, 512, 256, 128) if Np % t == 0]
    tm, tk = cands[-1], cands[-1]
    picked = False
    for cm in cands:
        for ck in cands:
            if foot(cm, ck) <= _VMEM_BLOCK_BUDGET:
                tm, tk, picked = cm, ck, True
                break
        if picked:
            break
    # TODO(synk): tile Fv / Fo as well when feature widths are so large that
    #             even (128, 128) adjacency tiles exceed the VMEM budget.

    in_specs = [
        pl.BlockSpec((None, tm, tk), lambda b, i, k: (b, i, k)),
        pl.BlockSpec((None, tk, Fv), lambda b, i, k: (b, k, 0)),
    ]
    args = [adj_in, v]
    if has_w:
        in_specs.append(pl.BlockSpec(w_res.shape, lambda b, i, k: (0, 0)))
        args.append(w_res)
    if has_bias:
        in_specs.append(pl.BlockSpec((1, Fo), lambda b, i, k: (0, 0)))
        args.append(bias_row)

    return pl.pallas_call(
        _make_spmm_ktiled_kernel(compute_dtype, has_w, has_bias),
        out_shape=jax.ShapeDtypeStruct((B, Np, Fo), out_dtype),
        grid=(B, Np // tm, Np // tk),
        in_specs=in_specs,
        out_specs=pl.BlockSpec((None, tm, Fo), lambda b, i, k: (b, i, 0)),
        scratch_shapes=[pltpu.VMEM((tm, Fv), jnp.float32)],
        compiler_params=pltpu.CompilerParams(
            dimension_semantics=("parallel", "parallel", "arbitrary"),
            vmem_limit_bytes=_vmem_limit(foot(tm, tk)),
        ),
    )(*args)


def _spmm(adj_in, v, w_res, bias_row, out_dtype, compute_dtype, variant="auto"):
    """O[b] = (adj_in[b] @ v[b]) [@ w_res] [+ bias_row] on padded/aligned shapes."""
    B, Np, _ = adj_in.shape
    Fv = v.shape[2]
    has_w = w_res is not None
    Fo = w_res.shape[1] if has_w else Fv
    adj_isz = adj_in.dtype.itemsize
    o_isz = jnp.dtype(out_dtype).itemsize
    v_bytes = Np * Fv * v.dtype.itemsize
    w_bytes = (w_res.size * w_res.dtype.itemsize) if has_w else 0

    if variant in ("auto", "resident") and v_bytes <= _RESIDENT_V_MAX:
        for tm in (512, 256, 128):
            if Np % tm:
                continue
            foot = (2 * tm * Np * adj_isz + 2 * v_bytes + 2 * w_bytes
                    + 2 * tm * Fo * o_isz + tm * Fv * 4 + tm * Fo * 4)
            if foot <= _VMEM_BLOCK_BUDGET:
                return _spmm_resident(adj_in, v, w_res, bias_row, out_dtype,
                                      compute_dtype, tm, foot)
    if variant == "resident":
        raise ValueError("resident spmm variant does not fit VMEM for these shapes")
    return _spmm_ktiled(adj_in, v, w_res, bias_row, out_dtype, compute_dtype)


# ---------------------------------------------------------------------------
# Public entry point: GraphConvolution forward.
# ---------------------------------------------------------------------------
def graph_convolution(x, adj, weight, bias=None, *,
                      compute_dtype=jnp.bfloat16, spmm_variant="auto"):
    """x: (B, N, F_in), adj: (B, N, N), weight: (F_in, F_out), bias: (1,1,F_out)|None."""
    B, N, F_in = x.shape
    F_out = weight.shape[1]
    assert adj.shape == (B, N, N)
    assert weight.shape == (F_in, F_out)
    out_dtype = x.dtype

    Np = _round_up(N, 128)      # node axis padded only to lane alignment
    Fi = _round_up(F_in, 128)
    Fo = _round_up(F_out, 128)

    x_p = jnp.pad(x, ((0, 0), (0, Np - N), (0, Fi - F_in))).astype(compute_dtype)
    w_p = jnp.pad(weight, ((0, Fi - F_in), (0, Fo - F_out))).astype(compute_dtype)
    if bias is not None:
        assert bias.shape == (1, 1, F_out)
        bias_row = jnp.pad(bias.reshape(1, F_out).astype(jnp.float32),
                           ((0, 0), (0, Fo - F_out)))
    else:
        bias_row = None

    # Adjacency (dominant HBM stream): avoid the wrapper-side pad+cast copy when
    # N is already 128-aligned; the kernel casts per tile from the stored dtype.
    if Np == N:
        adj_in = adj
    else:
        adj_in = jnp.pad(adj, ((0, 0), (0, Np - N), (0, Np - N))).astype(compute_dtype)

    c_isz = jnp.dtype(compute_dtype).itemsize
    fuse_w = (Fi < Fo) and (Fi * Fo * c_isz <= _FUSE_W_MAX)

    if fuse_w:
        # Fused (adj @ x) @ W: O(N^2) matmul at the narrow width Fi, width-Fo
        # matmul in the finalize; the (B, Np, Fi) intermediate never hits HBM.
        # Note: the intermediate is rounded to compute_dtype before @ W.
        out_p = _spmm(adj_in, x_p, w_p, bias_row, out_dtype, compute_dtype,
                      variant=spmm_variant)
    elif Fi < Fo:
        # W too large to keep resident: two passes, narrow matmul first.
        tmp = _spmm(adj_in, x_p, None, None, compute_dtype, compute_dtype,
                    variant=spmm_variant)
        out_p = _feat_matmul(tmp.reshape(B * Np, Fi), w_p, bias_row,
                             out_dtype).reshape(B, Np, Fo)
    else:
        # adj @ (x @ W): hoist x @ W into one large aligned matmul.
        support = _feat_matmul(x_p.reshape(B * Np, Fi), w_p, None,
                               compute_dtype).reshape(B, Np, Fo)
        out_p = _spmm(adj_in, support, None, bias_row, out_dtype, compute_dtype,
                      variant=spmm_variant)

    return out_p[:, :N, :F_out]


def init_gcn_params(key, in_features, out_features, bias=False):
    """Mirror reset_parameters(): U(-stdv, stdv), stdv = 1/sqrt(out_features)."""
    stdv = 1.0 / math.sqrt(out_features)
    kw, kb = jax.random.split(key)
    weight = jax.random.uniform(
        kw, (in_features, out_features), jnp.float32, minval=-stdv, maxval=stdv)
    b = (jax.random.uniform(kb, (1, 1, out_features), jnp.float32,
                            minval=-stdv, maxval=stdv) if bias else None)
    return weight, b


if __name__ == "__main__":
    key = jax.random.PRNGKey(0)
    k_x, k_adj, k_param, k_w2 = jax.random.split(key, 4)

    B, N, F_in, F_out = 2, 8, 16, 32

    x = jax.random.normal(k_x, (B, N, F_in), jnp.float32)
    adj = jax.random.uniform(k_adj, (B, N, N), jnp.float32)
    adj = adj / jnp.sum(adj, axis=-1, keepdims=True)   # row-normalized adjacency

    weight, bias = init_gcn_params(k_param, F_in, F_out, bias=True)

    ref = jnp.matmul(adj, jnp.matmul(x, weight)) + bias

    # f32 compute path: validates the tiling / padding structure exactly.
    out_f32 = jax.block_until_ready(
        graph_convolution(x, adj, weight, bias, compute_dtype=jnp.float32))
    assert out_f32.shape == (B, N, F_out)
    assert jnp.allclose(out_f32, ref, atol=1e-5, rtol=1e-5), "mismatch (f32 path)"

    # Default bf16 MXU path: loose tolerance vs the f32 reference.
    out_bf16 = jax.block_until_ready(graph_convolution(x, adj, weight, bias))
    assert jnp.allclose(out_bf16, ref, atol=3e-2, rtol=3e-2), "mismatch (bf16 path)"

    # bias=False path (the module's default).
    ref_nb = jnp.matmul(adj, jnp.matmul(x, weight))
    out_nb = jax.block_until_ready(
        graph_convolution(x, adj, weight, None, compute_dtype=jnp.float32))
    assert jnp.allclose(out_nb, ref_nb, atol=1e-5, rtol=1e-5), "mismatch (no bias)"

    # Wide-output layer exercises the fused (adj @ x) @ W order.
    F_out2 = 256
    stdv2 = 1.0 / math.sqrt(F_out2)
    w2 = jax.random.uniform(k_w2, (F_in, F_out2), jnp.float32,
                            minval=-stdv2, maxval=stdv2)
    ref2 = jnp.matmul(adj, jnp.matmul(x, w2))
    out2 = jax.block_until_ready(
        graph_convolution(x, adj, w2, None, compute_dtype=jnp.float32))
    assert jnp.allclose(out2, ref2, atol=1e-4, rtol=1e-4), "mismatch (fused order)"

    # Exercise the k-tiled streamed-V fallback (used for very large graphs).
    out_kt = jax.block_until_ready(
        graph_convolution(x, adj, weight, bias, compute_dtype=jnp.float32,
                          spmm_variant="ktiled"))
    assert jnp.allclose(out_kt, ref, atol=1e-5, rtol=1e-5), "mismatch (k-tiled)"
    out_kt2 = jax.block_until_ready(
        graph_convolution(x, adj, w2, None, compute_dtype=jnp.float32,
                          spmm_variant="ktiled"))
    assert jnp.allclose(out_kt2, ref2, atol=1e-4, rtol=1e-4), "mismatch (k-tiled fused)"

    print("KERNEL_OK")
</pallas_src>

<mosaic_0001>
module attributes {stable_mosaic.version = 11 : i64} {
  func.func @kernel(%arg0: i32, %arg1: i32, %arg2: memref<256x128xf32, #tpu.memory_space<vmem>>, %arg3: memref<128x128xf32, #tpu.memory_space<vmem>>, %arg4: memref<256x128xf32, #tpu.memory_space<vmem>>) attributes {dimension_semantics = [#tpu.dimension_semantics<parallel>, #tpu.dimension_semantics<parallel>], iteration_bounds = array<i64: 1, 1>, scalar_prefetch = 0 : i64, scratch_operands = 0 : i64, tpu.core_type = #tpu.core_type<tc>, window_params = [{transform_indices = @transform_0, window_bounds = array<i64: 256, 128>}, {transform_indices = @transform_1, window_bounds = array<i64: 128, 128>}, {transform_indices = @transform_2, window_bounds = array<i64: 256, 128>}]} {
    %c0 = arith.constant 0 : index
    %c0_0 = arith.constant 0 : index
    %0 = vector.load %arg2[%c0, %c0_0] : memref<256x128xf32, #tpu.memory_space<vmem>>, vector<256x128xf32>
    %c0_1 = arith.constant 0 : index
    %c0_2 = arith.constant 0 : index
    %1 = vector.load %arg3[%c0_1, %c0_2] : memref<128x128xf32, #tpu.memory_space<vmem>>, vector<128x128xf32>
    %cst = arith.constant dense<0.000000e+00> : vector<256x128xf32>
    %2 = tpu.matmul %0, %1, %cst {dimension_numbers = #tpu.dot_dimension_numbers<[1], [0], [0], [1], [0, 0, 1, 1], [], []>} : vector<256x128xf32>, vector<128x128xf32>, vector<256x128xf32> -> vector<256x128xf32>
    %c0_3 = arith.constant 0 : index
    %c0_4 = arith.constant 0 : index
    %3 = vector.load %arg4[%c0_3, %c0_4] : memref<256x128xf32, #tpu.memory_space<vmem>>, vector<256x128xf32>
    tpu.vector_store %arg4[%c0_3, %c0_4], %2 {strides = array<i32>} : memref<256x128xf32, #tpu.memory_space<vmem>>, vector<256x128xf32>,
    return
  }
  func.func @transform_0(%arg0: i32, %arg1: i32) -> (i32, i32) {
    %c0_i32 = arith.constant 0 : i32
    %c0_i32_0 = arith.constant 0 : i32
    return %arg0, %c0_i32 : i32, i32
  }
  func.func @transform_1(%arg0: i32, %arg1: i32) -> (i32, i32) {
    %c0_i32 = arith.constant 0 : i32
    %c0_i32_0 = arith.constant 0 : i32
    return %c0_i32, %arg1 : i32, i32
  }
  func.func @transform_2(%arg0: i32, %arg1: i32) -> (i32, i32) {
    %c0_i32 = arith.constant 0 : i32
    return %arg0, %arg1 : i32, i32
  }
}

</mosaic_0001>

<llo_original>
// kernel: tpu_custom_call.1
$region0: #{tpu_custom_call.1}
  #allocation0 [shape = 'u32[]', space=smem, size = 0x4, offset = 0x4, fixed_abs, tag = 'smem constant byte address 0x4 - core index']
  #allocation1 [shape = 'u32[144,128]{1,0:T(1,128)}', space=vmem, size = 0x12000, scoped, tag = 'internal scratch']
  %s0 = inlined_call_operand.hbm [shape: f32[256,128], index: 0, kind: input, shape index: {}]
  %s1 = inlined_call_operand.hbm [shape: f32[128,128], index: 1, kind: input, shape index: {}]
  %s2 = inlined_call_operand.hbm [shape: f32[256,128], index: 2, kind: output, shape index: {}]
  %s3 = sld [smem:[#allocation0]]
  $region26: #{tpu_custom_call.1} parent=0
    _
  %s5 = ssub.s32 1, %s3
  %s6 = scalar_select 0, %s5, %s3
  $region1: #{tpu_custom_call.1} parent=0
    #allocation2 [shape = 'u8[131072]{0}', space=vmem, size = 0x20000, scoped, tag = 'input window, operand 0, single buffered']
    #allocation3 [shape = 's32[1]{0}', space=sflag, size = 0x4, scoped, tag = 'scoped memory for tpu_custom_call.1']
    #allocation4 [shape = 's32[1]{0}', space=sflag, size = 0x4, scoped, tag = 'scoped memory for tpu_custom_call.1']
    #allocation5 [shape = 'u8[65536]{0}', space=vmem, size = 0x10000, scoped, tag = 'input window, operand 1, single buffered']
    #allocation6 [shape = 's32[1]{0}', space=sflag, size = 0x4, scoped, tag = 'scoped memory for tpu_custom_call.1']
    #allocation7 [shape = 'u8[131072]{0}', space=vmem, size = 0x20000, scoped, tag = 'output window, operand 0, single buffered']
    %7 = vsyncpa [#allocation3], 0
    %8 = vsyncpa [#allocation6], 0
    %9 = vsyncpa [#allocation4], 0
    // Predicated region
    $region2: #{tpu_custom_call.1} parent=1 // pred_check
      _
    $region3: #{tpu_custom_call.1} parent=1 // pred_check_branch
      %11 = sbr.rel (0) target = $region5
    $region4: #{tpu_custom_call.1} parent=1 // pred_region
      %s13 = ssub.s32 4096, 4096
      %14 = vsyncadd [#allocation3], %s13
      %s15 = sshll.u32 [#allocation2], 4
      %s16 = int_to_ptr.vmem [resolvable:$true] %s15
      %21 = dma.hbm_to_vmem [thread:$0]  %s0, 4096, %s16, [#allocation3], 128, 128, 8
    $region5: #{tpu_custom_call.1} parent=1 // pred_fallthru
      _
    // Predicated region
    $region6: #{tpu_custom_call.1} parent=1 // pred_check
      _
    $region7: #{tpu_custom_call.1} parent=1 // pred_check_branch
      %23 = sbr.rel (0) target = $region9
    $region8: #{tpu_custom_call.1} parent=1 // pred_region
      %s25 = ssub.s32 2048, 2048
      %26 = vsyncadd [#allocation6], %s25
      %s27 = sshll.u32 [#allocation5], 4
      %s28 = int_to_ptr.vmem [resolvable:$true] %s27
      %33 = dma.hbm_to_vmem [thread:$0]  %s1, 2048, %s28, [#allocation6], 128, 128, 8
    $region9: #{tpu_custom_call.1} parent=1 // pred_fallthru
      _
    // Predicated region
    $region10: #{tpu_custom_call.1} parent=1 // pred_check
      _
    $region11: #{tpu_custom_call.1} parent=1 // pred_check_branch
      %35 = sbr.rel (0) target = $region13
    $region12: #{tpu_custom_call.1} parent=1 // pred_region
      %36 = dma.done [#allocation3], 4096
    $region13: #{tpu_custom_call.1} parent=1 // pred_fallthru
      _
    // Predicated region
    $region14: #{tpu_custom_call.1} parent=1 // pred_check
      _
    $region15: #{tpu_custom_call.1} parent=1 // pred_check_branch
      %38 = sbr.rel (0) target = $region17
    $region16: #{tpu_custom_call.1} parent=1 // pred_region
      %39 = dma.done [#allocation6], 2048
    $region17: #{tpu_custom_call.1} parent=1 // pred_fallthru
      _
    %v40 = vld [vmem:[#allocation2] sm:$0xff]
    %v41 = vld [vmem:[#allocation2 + $0x8] sm:$0xff]
    %v42 = vld [vmem:[#allocation2 + $0x10] sm:$0xff]
    %v43 = vld [vmem:[#allocation2 + $0x18] sm:$0xff]
    %v44 = vld [vmem:[#allocation2 + $0x20] sm:$0xff]
    %v45 = vld [vmem:[#allocation2 + $0x28] sm:$0xff]
    %v46 = vld [vmem:[#allocation2 + $0x30] sm:$0xff]
    %v47 = vld [vmem:[#allocation2 + $0x38] sm:$0xff]
    %v48 = vld [vmem:[#allocation2 + $0x40] sm:$0xff]
    %v49 = vld [vmem:[#allocation2 + $0x48] sm:$0xff]
    %v50 = vld [vmem:[#allocation2 + $0x50] sm:$0xff]
    %v51 = vld [vmem:[#allocation2 + $0x58] sm:$0xff]
    %v52 = vld [vmem:[#allocation2 + $0x60] sm:$0xff]
    %v53 = vld [vmem:[#allocation2 + $0x68] sm:$0xff]
    %v54 = vld [vmem:[#allocation2 + $0x70] sm:$0xff]
    %v55 = vld [vmem:[#allocation2 + $0x78] sm:$0xff]
    %v56 = vld [vmem:[#allocation2 + $0x80] sm:$0xff]
    %v57 = vld [vmem:[#allocation2 + $0x88] sm:$0xff]
    %v58 = vld [vmem:[#allocation2 + $0x90] sm:$0xff]
    %v59 = vld [vmem:[#allocation2 + $0x98] sm:$0xff]
    %v60 = vld [vmem:[#allocation2 + $0xa0] sm:$0xff]
    %v61 = vld [vmem:[#allocation2 + $0xa8] sm:$0xff]
    %v62 = vld [vmem:[#allocation2 + $0xb0] sm:$0xff]
    %v63 = vld [vmem:[#allocation2 + $0xb8] sm:$0xff]
    %v64 = vld [vmem:[#allocation2 + $0xc0] sm:$0xff]
    %v65 = vld [vmem:[#allocation2 + $0xc8] sm:$0xff]
    %v66 = vld [vmem:[#allocation2 + $0xd0] sm:$0xff]
    %v67 = vld [vmem:[#allocation2 + $0xd8] sm:$0xff]
    %v68 = vld [vmem:[#allocation2 + $0xe0] sm:$0xff]
    %v69 = vld [vmem:[#allocation2 + $0xe8] sm:$0xff]
    %v70 = vld [vmem:[#allocation2 + $0xf0] sm:$0xff]
    %v71 = vld [vmem:[#allocation2 + $0xf8] sm:$0xff]
    %v72 = vld [vmem:[#allocation5] sm:$0xff]
    %v73 = vld [vmem:[#allocation5 + $0x8] sm:$0xff]
    %v74 = vld [vmem:[#allocation5 + $0x10] sm:$0xff]
    %v75 = vld [vmem:[#allocation5 + $0x18] sm:$0xff]
    %v76 = vld [vmem:[#allocation5 + $0x20] sm:$0xff]
    %v77 = vld [vmem:[#allocation5 + $0x28] sm:$0xff]
    %v78 = vld [vmem:[#allocation5 + $0x30] sm:$0xff]
    %v79 = vld [vmem:[#allocation5 + $0x38] sm:$0xff]
    %v80 = vld [vmem:[#allocation5 + $0x40] sm:$0xff]
    %v81 = vld [vmem:[#allocation5 + $0x48] sm:$0xff]
    %v82 = vld [vmem:[#allocation5 + $0x50] sm:$0xff]
    %v83 = vld [vmem:[#allocation5 + $0x58] sm:$0xff]
    %v84 = vld [vmem:[#allocation5 + $0x60] sm:$0xff]
    %v85 = vld [vmem:[#allocation5 + $0x68] sm:$0xff]
    %v86 = vld [vmem:[#allocation5 + $0x70] sm:$0xff]
    %v87 = vld [vmem:[#allocation5 + $0x78] sm:$0xff]
    %88 = vmatprep.subr.mxu0 0.0
    %89 = vmatpush1.msra.mxu0 %v72
    %90 = vmatprep.subr.mxu0 0.0
    %91 = vmatpush1.msra.mxu0 %v73
    %92 = vmatprep.subr.mxu0 0.0
    %93 = vmatpush1.msra.mxu0 %v74
    %94 = vmatprep.subr.mxu0 0.0
    %95 = vmatpush1.msra.mxu0 %v75
    %96 = vmatprep.subr.mxu0 0.0
    %97 = vmatpush1.msra.mxu0 %v76
    %98 = vmatprep.subr.mxu0 0.0
    %99 = vmatpush1.msra.mxu0 %v77
    %100 = vmatprep.subr.mxu0 0.0
    %101 = vmatpush1.msra.mxu0 %v78
    %102 = vmatprep.subr.mxu0 0.0
    %103 = vmatpush1.msra.mxu0 %v79
    %104 = vmatprep.subr.mxu0 0.0
    %105 = vmatpush1.msra.mxu0 %v80
    %106 = vmatprep.subr.mxu0 0.0
    %107 = vmatpush1.msra.mxu0 %v81
    %108 = vmatprep.subr.mxu0 0.0
    %109 = vmatpush1.msra.mxu0 %v82
    %110 = vmatprep.subr.mxu0 0.0
    %111 = vmatpush1.msra.mxu0 %v83
    %112 = vmatprep.subr.mxu0 0.0
    %113 = vmatpush1.msra.mxu0 %v84
    %114 = vmatprep.subr.mxu0 0.0
    %115 = vmatpush1.msra.mxu0 %v85
    %116 = vmatprep.subr.mxu0 0.0
    %117 = vmatpush1.msra.mxu0 %v86
    %118 = vmatprep.subr.mxu0 0.0
    %119 = vmatpush1.msra.mxu0 %v87
    %120 = vmatprep.subr.mxu0 0.0
    %121 = vmatpush1.msra.mxu0 0.0
    %122 = vmatprep.subr.mxu0 0.0
    %123 = vmatpush1.msra.mxu0 0.0
    %124 = vmatprep.subr.mxu0 0.0
    %125 = vmatpush1.msra.mxu0 0.0
    %126 = vmatprep.subr.mxu0 0.0
    %127 = vmatpush1.msra.mxu0 0.0
    %128 = vmatprep.subr.mxu0 0.0
    %129 = vmatpush1.msra.mxu0 0.0
    %130 = vmatprep.subr.mxu0 0.0
    %131 = vmatpush1.msra.mxu0 0.0
    %132 = vmatprep.subr.mxu0 0.0
    %133 = vmatpush1.msra.mxu0 0.0
    %134 = vmatprep.subr.mxu0 0.0
    %135 = vmatpush1.msra.mxu0 0.0
    %136 = vmatprep.subr.mxu0 0.0
    %137 = vmatpush1.msra.mxu0 0.0
    %138 = vmatprep.subr.mxu0 0.0
    %139 = vmatpush1.msra.mxu0 0.0
    %140 = vmatprep.subr.mxu0 0.0
    %141 = vmatpush1.msra.mxu0 0.0
    %142 = vmatprep.subr.mxu0 0.0
    %143 = vmatpush1.msra.mxu0 0.0
    %144 = vmatprep.subr.mxu0 0.0
    %145 = vmatpush1.msra.mxu0 0.0
    %146 = vmatprep.subr.mxu0 0.0
    %147 = vmatpush1.msra.mxu0 0.0
    %148 = vmatprep.subr.mxu0 0.0
    %149 = vmatpush1.msra.mxu0 0.0
    %150 = vmatprep.subr.mxu0 0.0
    %151 = vmatpush1.msra.mxu0 0.0
    %152 = vmatprep.mubr.f32.mxu0 0.0
    %153 = vmatmul.mubr.f32.gmra.mrb[0].mxu0 %v40
    %v154 = vpop.f32.mrb[0].mxu0
    %v155 = vadd.f32 0.0, %v154
    %v156 = vpop.f32.mrb[0].mxu0
    %157 = vmatprep.mubr.f32.mxu0 0.0
    %158 = vmatmul.mubr.f32.gmra.mrb[0].mxu0 %v41
    %v159 = vpop.f32.mrb[0].mxu0
    %v160 = vadd.f32 0.0, %v159
    %v161 = vpop.f32.mrb[0].mxu0
    %162 = vmatprep.mubr.f32.mxu0 0.0
    %163 = vmatmul.mubr.f32.gmra.mrb[0].mxu0 %v42
    %v164 = vpop.f32.mrb[0].mxu0
    %v165 = vadd.f32 0.0, %v164
    %v166 = vpop.f32.mrb[0].mxu0
    %167 = vmatprep.mubr.f32.mxu0 0.0
    %168 = vmatmul.mubr.f32.gmra.mrb[0].mxu0 %v43
    %v169 = vpop.f32.mrb[0].mxu0
    %v170 = vadd.f32 0.0, %v169
    %v171 = vpop.f32.mrb[0].mxu0
    %172 = vmatprep.mubr.f32.mxu0 0.0
    %173 = vmatmul.mubr.f32.gmra.mrb[0].mxu0 %v44
    %v174 = vpop.f32.mrb[0].mxu0
    %v175 = vadd.f32 0.0, %v174
    %v176 = vpop.f32.mrb[0].mxu0
    %177 = vmatprep.mubr.f32.mxu0 0.0
    %178 = vmatmul.mubr.f32.gmra.mrb[0].mxu0 %v45
    %v179 = vpop.f32.mrb[0].mxu0
    %v180 = vadd.f32 0.0, %v179
    %v181 = vpop.f32.mrb[0].mxu0
    %182 = vmatprep.mubr.f32.mxu0 0.0
    %183 = vmatmul.mubr.f32.gmra.mrb[0].mxu0 %v46
    %v184 = vpop.f32.mrb[0].mxu0
    %v185 = vadd.f32 0.0, %v184
    %v186 = vpop.f32.mrb[0].mxu0
    %187 = vmatprep.mubr.f32.mxu0 0.0
    %188 = vmatmul.mubr.f32.gmra.mrb[0].mxu0 %v47
    %v189 = vpop.f32.mrb[0].mxu0
    %v190 = vadd.f32 0.0, %v189
    %v191 = vpop.f32.mrb[0].mxu0
    %192 = vmatprep.mubr.f32.mxu0 0.0
    %193 = vmatmul.mubr.f32.gmra.mrb[0].mxu0 %v48
    %v194 = vpop.f32.mrb[0].mxu0
    %v195 = vadd.f32 0.0, %v194
    %v196 = vpop.f32.mrb[0].mxu0
    %197 = vmatprep.mubr.f32.mxu0 0.0
    %198 = vmatmul.mubr.f32.gmra.mrb[0].mxu0 %v49
    %v199 = vpop.f32.mrb[0].mxu0
    %v200 = vadd.f32 0.0, %v199
    %v201 = vpop.f32.mrb[0].mxu0
    %202 = vmatprep.mubr.f32.mxu0 0.0
    %203 = vmatmul.mubr.f32.gmra.mrb[0].mxu0 %v50
    %v204 = vpop.f32.mrb[0].mxu0
    %v205 = vadd.f32 0.0, %v204
    %v206 = vpop.f32.mrb[0].mxu0
    %207 = vmatprep.mubr.f32.mxu0 0.0
    %208 = vmatmul.mubr.f32.gmra.mrb[0].mxu0 %v51
    %v209 = vpop.f32.mrb[0].mxu0
    %v210 = vadd.f32 0.0, %v209
    %v211 = vpop.f32.mrb[0].mxu0
    %212 = vmatprep.mubr.f32.mxu0 0.0
    %213 = vmatmul.mubr.f32.gmra.mrb[0].mxu0 %v52
    %v214 = vpop.f32.mrb[0].mxu0
    %v215 = vadd.f32 0.0, %v214
    %v216 = vpop.f32.mrb[0].mxu0
    %217 = vmatprep.mubr.f32.mxu0 0.0
    %218 = vmatmul.mubr.f32.gmra.mrb[0].mxu0 %v53
    %v219 = vpop.f32.mrb[0].mxu0
    %v220 = vadd.f32 0.0, %v219
    %v221 = vpop.f32.mrb[0].mxu0
    %222 = vmatprep.mubr.f32.mxu0 0.0
    %223 = vmatmul.mubr.f32.gmra.mrb[0].mxu0 %v54
    %v224 = vpop.f32.mrb[0].mxu0
    %v225 = vadd.f32 0.0, %v224
    %v226 = vpop.f32.mrb[0].mxu0
    %227 = vmatprep.mubr.f32.mxu0 0.0
    %228 = vmatmul.mubr.f32.gmra.mrb[0].mxu0 %v55
    %v229 = vpop.f32.mrb[0].mxu0
    %v230 = vadd.f32 0.0, %v229
    %v231 = vpop.f32.mrb[0].mxu0
    %232 = vmatprep.mubr.f32.mxu0 0.0
    %233 = vmatmul.mubr.f32.gmra.mrb[0].mxu0 %v56
    %v234 = vpop.f32.mrb[0].mxu0
    %v235 = vadd.f32 0.0, %v234
    %v236 = vpop.f32.mrb[0].mxu0
    %237 = vmatprep.mubr.f32.mxu0 0.0
    %238 = vmatmul.mubr.f32.gmra.mrb[0].mxu0 %v57
    %v239 = vpop.f32.mrb[0].mxu0
    %v240 = vadd.f32 0.0, %v239
    %v241 = vpop.f32.mrb[0].mxu0
    %242 = vmatprep.mubr.f32.mxu0 0.0
    %243 = vmatmul.mubr.f32.gmra.mrb[0].mxu0 %v58
    %v244 = vpop.f32.mrb[0].mxu0
    %v245 = vadd.f32 0.0, %v244
    %v246 = vpop.f32.mrb[0].mxu0
    %247 = vmatprep.mubr.f32.mxu0 0.0
    %248 = vmatmul.mubr.f32.gmra.mrb[0].mxu0 %v59
    %v249 = vpop.f32.mrb[0].mxu0
    %v250 = vadd.f32 0.0, %v249
    %v251 = vpop.f32.mrb[0].mxu0
    %252 = vmatprep.mubr.f32.mxu0 0.0
    %253 = vmatmul.mubr.f32.gmra.mrb[0].mxu0 %v60
    %v254 = vpop.f32.mrb[0].mxu0
    %v255 = vadd.f32 0.0, %v254
    %v256 = vpop.f32.mrb[0].mxu0
    %257 = vmatprep.mubr.f32.mxu0 0.0
    %258 = vmatmul.mubr.f32.gmra.mrb[0].mxu0 %v61
    %v259 = vpop.f32.mrb[0].mxu0
    %v260 = vadd.f32 0.0, %v259
    %v261 = vpop.f32.mrb[0].mxu0
    %262 = vmatprep.mubr.f32.mxu0 0.0
    %263 = vmatmul.mubr.f32.gmra.mrb[0].mxu0 %v62
    %v264 = vpop.f32.mrb[0].mxu0
    %v265 = vadd.f32 0.0, %v264
    %v266 = vpop.f32.mrb[0].mxu0
    %267 = vmatprep.mubr.f32.mxu0 0.0
    %268 = vmatmul.mubr.f32.gmra.mrb[0].mxu0 %v63
    %v269 = vpop.f32.mrb[0].mxu0
    %v270 = vadd.f32 0.0, %v269
    %v271 = vpop.f32.mrb[0].mxu0
    %272 = vmatprep.mubr.f32.mxu0 0.0
    %273 = vmatmul.mubr.f32.gmra.mrb[0].mxu0 %v64
    %v274 = vpop.f32.mrb[0].mxu0
    %v275 = vadd.f32 0.0, %v274
    %v276 = vpop.f32.mrb[0].mxu0
    %277 = vmatprep.mubr.f32.mxu0 0.0
    %278 = vmatmul.mubr.f32.gmra.mrb[0].mxu0 %v65
    %v279 = vpop.f32.mrb[0].mxu0
    %v280 = vadd.f32 0.0, %v279
    %v281 = vpop.f32.mrb[0].mxu0
    %282 = vmatprep.mubr.f32.mxu0 0.0
    %283 = vmatmul.mubr.f32.gmra.mrb[0].mxu0 %v66
    %v284 = vpop.f32.mrb[0].mxu0
    %v285 = vadd.f32 0.0, %v284
    %v286 = vpop.f32.mrb[0].mxu0
    %287 = vmatprep.mubr.f32.mxu0 0.0
    %288 = vmatmul.mubr.f32.gmra.mrb[0].mxu0 %v67
    %v289 = vpop.f32.mrb[0].mxu0
    %v290 = vadd.f32 0.0, %v289
    %v291 = vpop.f32.mrb[0].mxu0
    %292 = vmatprep.mubr.f32.mxu0 0.0
    %293 = vmatmul.mubr.f32.gmra.mrb[0].mxu0 %v68
    %v294 = vpop.f32.mrb[0].mxu0
    %v295 = vadd.f32 0.0, %v294
    %v296 = vpop.f32.mrb[0].mxu0
    %297 = vmatprep.mubr.f32.mxu0 0.0
    %298 = vmatmul.mubr.f32.gmra.mrb[0].mxu0 %v69
    %v299 = vpop.f32.mrb[0].mxu0
    %v300 = vadd.f32 0.0, %v299
    %v301 = vpop.f32.mrb[0].mxu0
    %302 = vmatprep.mubr.f32.mxu0 0.0
    %303 = vmatmul.mubr.f32.gmra.mrb[0].mxu0 %v70
    %v304 = vpop.f32.mrb[0].mxu0
    %v305 = vadd.f32 0.0, %v304
    %v306 = vpop.f32.mrb[0].mxu0
    %307 = vmatprep.mubr.f32.mxu0 0.0
    %308 = vmatmul.mubr.f32.gmra.mrb[0].mxu0 %v71
    %v309 = vpop.f32.mrb[0].mxu0
    %v310 = vadd.f32 0.0, %v309
    %v311 = vpop.f32.mrb[0].mxu0
    %312 = vdwg.mxu0
    %313 = vst [vmem:[#allocation7] sm:$0xff] %v155
    %314 = vst [vmem:[#allocation7 + $0x8] sm:$0xff] %v160
    %315 = vst [vmem:[#allocation7 + $0x10] sm:$0xff] %v165
    %316 = vst [vmem:[#allocation7 + $0x18] sm:$0xff] %v170
    %317 = vst [vmem:[#allocation7 + $0x20] sm:$0xff] %v175
    %318 = vst [vmem:[#allocation7 + $0x28] sm:$0xff] %v180
    %319 = vst [vmem:[#allocation7 + $0x30] sm:$0xff] %v185
    %320 = vst [vmem:[#allocation7 + $0x38] sm:$0xff] %v190
    %321 = vst [vmem:[#allocation7 + $0x40] sm:$0xff] %v195
    %322 = vst [vmem:[#allocation7 + $0x48] sm:$0xff] %v200
    %323 = vst [vmem:[#allocation7 + $0x50] sm:$0xff] %v205
    %324 = vst [vmem:[#allocation7 + $0x58] sm:$0xff] %v210
    %325 = vst [vmem:[#allocation7 + $0x60] sm:$0xff] %v215
    %326 = vst [vmem:[#allocation7 + $0x68] sm:$0xff] %v220
    %327 = vst [vmem:[#allocation7 + $0x70] sm:$0xff] %v225
    %328 = vst [vmem:[#allocation7 + $0x78] sm:$0xff] %v230
    %329 = vst [vmem:[#allocation7 + $0x80] sm:$0xff] %v235
    %330 = vst [vmem:[#allocation7 + $0x88] sm:$0xff] %v240
    %331 = vst [vmem:[#allocation7 + $0x90] sm:$0xff] %v245
    %332 = vst [vmem:[#allocation7 + $0x98] sm:$0xff] %v250
    %333 = vst [vmem:[#allocation7 + $0xa0] sm:$0xff] %v255
    %334 = vst [vmem:[#allocation7 + $0xa8] sm:$0xff] %v260
    %335 = vst [vmem:[#allocation7 + $0xb0] sm:$0xff] %v265
    %336 = vst [vmem:[#allocation7 + $0xb8] sm:$0xff] %v270
    %337 = vst [vmem:[#allocation7 + $0xc0] sm:$0xff] %v275
    %338 = vst [vmem:[#allocation7 + $0xc8] sm:$0xff] %v280
    %339 = vst [vmem:[#allocation7 + $0xd0] sm:$0xff] %v285
    %340 = vst [vmem:[#allocation7 + $0xd8] sm:$0xff] %v290
    %341 = vst [vmem:[#allocation7 + $0xe0] sm:$0xff] %v295
    %342 = vst [vmem:[#allocation7 + $0xe8] sm:$0xff] %v300
    %343 = vst [vmem:[#allocation7 + $0xf0] sm:$0xff] %v305
    %344 = vst [vmem:[#allocation7 + $0xf8] sm:$0xff] %v310
    // Predicated region
    $region18: #{tpu_custom_call.1} parent=1 // pred_check
      _
    $region19: #{tpu_custom_call.1} parent=1 // pred_check_branch
      %346 = sbr.rel (0) target = $region21
    $region20: #{tpu_custom_call.1} parent=1 // pred_region
      %s348 = ssub.s32 4096, 4096
      %349 = vsyncadd [#allocation4], %s348
      %s350 = sshll.u32 [#allocation7], 4
      %s351 = int_to_ptr.vmem [resolvable:$true] %s350
      %356 = dma.vmem_to_hbm [thread:$0]  %s351, 4096, %s2, [#allocation4], 128, 128, 8
    $region21: #{tpu_custom_call.1} parent=1 // pred_fallthru
      _
    // Predicated region
    $region22: #{tpu_custom_call.1} parent=1 // pred_check
      _
    $region23: #{tpu_custom_call.1} parent=1 // pred_check_branch
      %358 = sbr.rel (0) target = $region25
    $region24: #{tpu_custom_call.1} parent=1 // pred_region
      %359 = dma.done [#allocation4], 4096
    $region25: #{tpu_custom_call.1} parent=1 // pred_fallthru
      _
    %360 = vsyncpa [#allocation3], 1
    %361 = vsyncpa [#allocation6], 1
    %362 = vsyncpa [#allocation4], 1

</llo_original>
